<compile_context>
chip_gen: v5e
topology: v5e:2x2
jax: 0.10.0
libtpu: 0.0.40
codegen_flags: <defaults>
</compile_context>

<pallas_src>
import jax
import jax.numpy as jnp
import numpy as np
from jax.experimental import pallas as pl
from jax.experimental.pallas import tpu as pltpu

_BN_EPS = 1e-5


# ---------------------------------------------------------------------------
# Kernel
# ---------------------------------------------------------------------------
def _conv_bn_relu_stage(inp, l_ref, r_ref, pb_ref, center_is_identity):
    """One Conv3x3 + folded-BN + ReLU on a lane-packed activation.

    inp:    (H_in, W_in*Cin)  packed activation
    l_ref:  (3, H_out, H_in)  0/1 row shift/selection matrices (one per dy tap)
    r_ref:  (3, W_in*Cin, W_out*Cout) banded tap matrices (BN scale folded in)
    pb_ref: (1, W_out*Cout)   packed bias (conv bias + BN folded)
    """
    cd = r_ref.dtype
    inp_c = inp.astype(cd)
    if center_is_identity:
        # stride-1 center tap: L[1] is the identity -> skip the shift matmul.
        acc = jnp.dot(inp_c, r_ref[1], preferred_element_type=jnp.float32)
    else:
        sel = jnp.dot(l_ref[1], inp_c,
                      preferred_element_type=jnp.float32).astype(cd)
        acc = jnp.dot(sel, r_ref[1], preferred_element_type=jnp.float32)
    for dy in (0, 2):
        sel = jnp.dot(l_ref[dy], inp_c,
                      preferred_element_type=jnp.float32).astype(cd)
        acc = acc + jnp.dot(sel, r_ref[dy], preferred_element_type=jnp.float32)
    return jnp.maximum(acc + pb_ref[...], 0.0)


def _fused_downsample_kernel(x_ref, l1_ref, ls_ref, r1_ref, r2_ref, r3_ref,
                             pb1_ref, pb2_ref, pb3_ref, out_ref, out2_ref):
    """Whole DownsampleLayer forward for one batch element, all in VMEM.

    x_ref:    (1, H, W*Cin)        packed input
    l1_ref:   (3, H, H)            stride-1 row shift matrices
    ls_ref:   (3, Ho, H)           stride-2 row selection matrices
    r1/2/3:   banded tap matrices for the three convs (BN scale folded)
    pb1/2/3:  packed per-channel biases
    out_ref:  (1, H, W*Cout)       output of Conv_BN_ReLU_2 (lane-dense: 128)
    out2_ref: (1, Ho, Wo*Cout)     output of the stride-2 downsample branch
    """
    x = x_ref[0]
    h = _conv_bn_relu_stage(x, l1_ref, r1_ref, pb1_ref, center_is_identity=True)
    o = _conv_bn_relu_stage(h, l1_ref, r2_ref, pb2_ref, center_is_identity=True)
    o2 = _conv_bn_relu_stage(o, ls_ref, r3_ref, pb3_ref, center_is_identity=False)
    out_ref[0] = o.astype(out_ref.dtype)
    out2_ref[0] = o2.astype(out2_ref.dtype)


# ---------------------------------------------------------------------------
# Host-side weight preprocessing (done once per call, tiny)
# ---------------------------------------------------------------------------
def _shift_matrices(h_in, h_out, stride):
    """L[dy, y_out, y_in] = 1 iff y_in == stride*y_out + dy - 1 (pad=1)."""
    L = np.zeros((3, h_out, h_in), np.float32)
    for dy in range(3):
        for y in range(h_out):
            yin = stride * y + dy - 1
            if 0 <= yin < h_in:
                L[dy, y, yin] = 1.0
    return L


def _band_matrices(w, scale, w_in, w_out, stride):
    """Banded tap matrices R[dy]: (w_in*Cin, w_out*Cout), BN scale folded in.

    R[dy, wi*Cin + ci, wo*Cout + co] = w[dy, dx, ci, co] * scale[co]
      with wi = stride*wo + dx - 1 (SAME padding along W folded in as zeros).
    """
    kh, kw, cin, cout = w.shape
    S = np.zeros((kw, w_in, w_out), np.float32)
    for dx in range(kw):
        for wo in range(w_out):
            wi = stride * wo + dx - 1
            if 0 <= wi < w_in:
                S[dx, wi, wo] = 1.0
    w_s = w * scale[None, None, None, :]
    R = jnp.einsum("xio,yxck->yicok", S, w_s,
                   precision=jax.lax.Precision.HIGHEST)
    return R.reshape(kh, w_in * cin, w_out * cout)


# ---------------------------------------------------------------------------
# Public wrapper (NCHW in / NCHW out, like the PyTorch module)
# ---------------------------------------------------------------------------
def downsample_layer(x_nchw, params, *, use_bf16_matmuls=False):
    """Forward of DownsampleLayer. Returns (out, out_2) in NCHW."""
    N, cin, H, W = x_nchw.shape
    cout = params["w1"].shape[-1]
    Ho = (H - 1) // 2 + 1   # PyTorch Conv2d(k=3, s=2, p=1) output size
    Wo = (W - 1) // 2 + 1

    cd = jnp.bfloat16 if use_bf16_matmuls else jnp.float32

    # Pack NCHW -> (N, H, W*Cin); lane-dense packed layout for the kernel.
    x_packed = (jnp.transpose(x_nchw, (0, 2, 3, 1))
                .reshape(N, H, W * cin).astype(cd))

    # Precompute shift / banded matrices (BN scale folded) and packed biases.
    l1 = jnp.asarray(_shift_matrices(H, H, 1), cd)
    ls = jnp.asarray(_shift_matrices(H, Ho, 2), cd)
    r1 = _band_matrices(params["w1"], params["s1"], W, W, 1).astype(cd)
    r2 = _band_matrices(params["w2"], params["s2"], W, W, 1).astype(cd)
    r3 = _band_matrices(params["w3"], params["s3"], W, Wo, 2).astype(cd)
    pb1 = jnp.tile(params["b1"], W).reshape(1, W * cout).astype(jnp.float32)
    pb2 = jnp.tile(params["b2"], W).reshape(1, W * cout).astype(jnp.float32)
    pb3 = jnp.tile(params["b3"], Wo).reshape(1, Wo * cout).astype(jnp.float32)

    const3 = lambda n: (0, 0, 0)
    const2 = lambda n: (0, 0)

    out_p, out2_p = pl.pallas_call(
        _fused_downsample_kernel,
        out_shape=(jax.ShapeDtypeStruct((N, H, W * cout), jnp.float32),
                   jax.ShapeDtypeStruct((N, Ho, Wo * cout), jnp.float32)),
        grid=(N,),
        in_specs=[
            pl.BlockSpec((1, H, W * cin), lambda n: (n, 0, 0)),
            pl.BlockSpec((3, H, H), const3),
            pl.BlockSpec((3, Ho, H), const3),
            pl.BlockSpec((3, W * cin, W * cout), const3),
            pl.BlockSpec((3, W * cout, W * cout), const3),
            pl.BlockSpec((3, W * cout, Wo * cout), const3),
            pl.BlockSpec((1, W * cout), const2),
            pl.BlockSpec((1, W * cout), const2),
            pl.BlockSpec((1, Wo * cout), const2),
        ],
        out_specs=(pl.BlockSpec((1, H, W * cout), lambda n: (n, 0, 0)),
                   pl.BlockSpec((1, Ho, Wo * cout), lambda n: (n, 0, 0))),
        compiler_params=pltpu.CompilerParams(
            dimension_semantics=("parallel",)),
    )(x_packed, l1, ls, r1, r2, r3, pb1, pb2, pb3)

    out = jnp.transpose(out_p.reshape(N, H, W, cout), (0, 3, 1, 2))
    out2 = jnp.transpose(out2_p.reshape(N, Ho, Wo, cout), (0, 3, 1, 2))
    return out, out2


# ---------------------------------------------------------------------------
# Parameters / reference
# ---------------------------------------------------------------------------
def _fold_bn(conv_bias, gamma, beta, running_mean, running_var):
    s = gamma / jnp.sqrt(running_var + _BN_EPS)
    b = (conv_bias - running_mean) * s + beta
    return s, b


def init_params(key, in_ch, out_ch):
    """Deterministic init. Conv: PyTorch-like uniform(+-1/sqrt(fan_in)).
    BN: gamma=1, beta=0, running_mean=0, running_var=1 (defaults)."""
    def conv_init(k, cin, cout):
        kw, kb = jax.random.split(k)
        bound = 1.0 / float(np.sqrt(cin * 9))
        w = jax.random.uniform(kw, (3, 3, cin, cout), jnp.float32, -bound, bound)
        b = jax.random.uniform(kb, (cout,), jnp.float32, -bound, bound)
        return w, b

    k1, k2, k3 = jax.random.split(key, 3)
    w1, cb1 = conv_init(k1, in_ch, out_ch)
    w2, cb2 = conv_init(k2, out_ch, out_ch)
    w3, cb3 = conv_init(k3, out_ch, out_ch)
    ones = jnp.ones((out_ch,), jnp.float32)
    zeros = jnp.zeros((out_ch,), jnp.float32)
    s1, b1 = _fold_bn(cb1, ones, zeros, zeros, ones)
    s2, b2 = _fold_bn(cb2, ones, zeros, zeros, ones)
    s3, b3 = _fold_bn(cb3, ones, zeros, zeros, ones)
    return dict(w1=w1, s1=s1, b1=b1,
                w2=w2, s2=s2, b2=b2,
                w3=w3, s3=s3, b3=b3)


def _reference(x_nchw, params):
    """Pure-JAX reference (lax.conv) for correctness checking."""
    def conv(x_nhwc, w, s, b, stride):
        y = jax.lax.conv_general_dilated(
            x_nhwc, w, window_strides=(stride, stride),
            padding=((1, 1), (1, 1)),
            dimension_numbers=("NHWC", "HWIO", "NHWC"),
            precision=jax.lax.Precision.HIGHEST)
        return jnp.maximum(y * s + b, 0.0)

    x = jnp.transpose(x_nchw, (0, 2, 3, 1)).astype(jnp.float32)
    h = conv(x, params["w1"], params["s1"], params["b1"], 1)
    out = conv(h, params["w2"], params["s2"], params["b2"], 1)
    out2 = conv(out, params["w3"], params["s3"], params["b3"], 2)
    return (jnp.transpose(out, (0, 3, 1, 2)),
            jnp.transpose(out2, (0, 3, 1, 2)))


if __name__ == "__main__":
    key = jax.random.PRNGKey(0)
    k_x, k_p = jax.random.split(key)

    N, in_ch, out_ch, H, W = 2, 4, 8, 16, 16
    x = jax.random.normal(k_x, (N, in_ch, H, W), jnp.float32)
    params = init_params(k_p, in_ch, out_ch)

    # f32 path
    out, out_2 = downsample_layer(x, params)
    out = jax.block_until_ready(out)
    out_2 = jax.block_until_ready(out_2)

    assert out.shape == (N, out_ch, H, W)
    assert out_2.shape == (N, out_ch, H // 2, W // 2)

    ref_out, ref_out_2 = _reference(x, params)
    np.testing.assert_allclose(np.asarray(out), np.asarray(ref_out),
                               rtol=1e-4, atol=1e-4)
    np.testing.assert_allclose(np.asarray(out_2), np.asarray(ref_out_2),
                               rtol=1e-4, atol=1e-4)

    # bf16-operand path (v6e/v7x MXU peak); f32 accumulation, looser tolerance.
    out_bf, out_2_bf = downsample_layer(x, params, use_bf16_matmuls=True)
    out_bf = jax.block_until_ready(out_bf)
    out_2_bf = jax.block_until_ready(out_2_bf)
    np.testing.assert_allclose(np.asarray(out_bf), np.asarray(ref_out),
                               rtol=5e-2, atol=5e-2)
    np.testing.assert_allclose(np.asarray(out_2_bf), np.asarray(ref_out_2),
                               rtol=5e-2, atol=5e-2)

    print("KERNEL_OK")
</pallas_src>

<mosaic_0001>
module attributes {stable_mosaic.version = 11 : i64} {
  func.func @_fused_downsample_kernel(%arg0: i32, %arg1: memref<1x16x64xf32, #tpu.memory_space<vmem>>, %arg2: memref<3x16x16xf32, #tpu.memory_space<vmem>>, %arg3: memref<3x8x16xf32, #tpu.memory_space<vmem>>, %arg4: memref<3x64x128xf32, #tpu.memory_space<vmem>>, %arg5: memref<3x128x128xf32, #tpu.memory_space<vmem>>, %arg6: memref<3x128x64xf32, #tpu.memory_space<vmem>>, %arg7: memref<1x128xf32, #tpu.memory_space<vmem>>, %arg8: memref<1x128xf32, #tpu.memory_space<vmem>>, %arg9: memref<1x64xf32, #tpu.memory_space<vmem>>, %arg10: memref<1x16x128xf32, #tpu.memory_space<vmem>>, %arg11: memref<1x8x64xf32, #tpu.memory_space<vmem>>) attributes {dimension_semantics = [#tpu.dimension_semantics<parallel>], iteration_bounds = array<i64: 2>, scalar_prefetch = 0 : i64, scratch_operands = 0 : i64, tpu.core_type = #tpu.core_type<tc>, window_params = [{transform_indices = @transform_0, window_bounds = array<i64: 1, 16, 64>}, {pipeline_mode = #tpu.pipeline_mode<synchronous>, transform_indices = @transform_1, window_bounds = array<i64: 3, 16, 16>}, {pipeline_mode = #tpu.pipeline_mode<synchronous>, transform_indices = @transform_2, window_bounds = array<i64: 3, 8, 16>}, {pipeline_mode = #tpu.pipeline_mode<synchronous>, transform_indices = @transform_3, window_bounds = array<i64: 3, 64, 128>}, {pipeline_mode = #tpu.pipeline_mode<synchronous>, transform_indices = @transform_4, window_bounds = array<i64: 3, 128, 128>}, {pipeline_mode = #tpu.pipeline_mode<synchronous>, transform_indices = @transform_5, window_bounds = array<i64: 3, 128, 64>}, {pipeline_mode = #tpu.pipeline_mode<synchronous>, transform_indices = @transform_6, window_bounds = array<i64: 1, 128>}, {pipeline_mode = #tpu.pipeline_mode<synchronous>, transform_indices = @transform_7, window_bounds = array<i64: 1, 128>}, {pipeline_mode = #tpu.pipeline_mode<synchronous>, transform_indices = @transform_8, window_bounds = array<i64: 1, 64>}, {transform_indices = @transform_9, window_bounds = array<i64: 1, 16, 128>}, {transform_indices = @transform_10, window_bounds = array<i64: 1, 8, 64>}]} {
    %c0 = arith.constant 0 : index
    %c0_0 = arith.constant 0 : index
    %c0_1 = arith.constant 0 : index
    %0 = vector.load %arg1[%c0, %c0_0, %c0_1] : memref<1x16x64xf32, #tpu.memory_space<vmem>>, vector<1x16x64xf32>
    %1 = vector.shape_cast %0 : vector<1x16x64xf32> to vector<16x64xf32>
    %c1 = arith.constant 1 : index
    %c0_2 = arith.constant 0 : index
    %c0_3 = arith.constant 0 : index
    %2 = vector.load %arg4[%c1, %c0_2, %c0_3] : memref<3x64x128xf32, #tpu.memory_space<vmem>>, vector<1x64x128xf32>
    %3 = vector.shape_cast %2 : vector<1x64x128xf32> to vector<64x128xf32>
    %cst = arith.constant dense<0.000000e+00> : vector<16x128xf32>
    %4 = tpu.matmul %1, %3, %cst {dimension_numbers = #tpu.dot_dimension_numbers<[1], [0], [0], [1], [0, 0, 1, 1], [], []>} : vector<16x64xf32>, vector<64x128xf32>, vector<16x128xf32> -> vector<16x128xf32>
    %c0_4 = arith.constant 0 : index
    %c0_5 = arith.constant 0 : index
    %c0_6 = arith.constant 0 : index
    %5 = vector.load %arg2[%c0_4, %c0_5, %c0_6] : memref<3x16x16xf32, #tpu.memory_space<vmem>>, vector<1x16x16xf32>
    %6 = vector.shape_cast %5 : vector<1x16x16xf32> to vector<16x16xf32>
    %cst_7 = arith.constant dense<0.000000e+00> : vector<16x64xf32>
    %7 = tpu.matmul %6, %1, %cst_7 {dimension_numbers = #tpu.dot_dimension_numbers<[1], [0], [0], [1], [0, 0, 1, 1], [], []>} : vector<16x16xf32>, vector<16x64xf32>, vector<16x64xf32> -> vector<16x64xf32>
    %c0_8 = arith.constant 0 : index
    %c0_9 = arith.constant 0 : index
    %c0_10 = arith.constant 0 : index
    %8 = vector.load %arg4[%c0_8, %c0_9, %c0_10] : memref<3x64x128xf32, #tpu.memory_space<vmem>>, vector<1x64x128xf32>
    %9 = vector.shape_cast %8 : vector<1x64x128xf32> to vector<64x128xf32>
    %cst_11 = arith.constant dense<0.000000e+00> : vector<16x128xf32>
    %10 = tpu.matmul %7, %9, %cst_11 {dimension_numbers = #tpu.dot_dimension_numbers<[1], [0], [0], [1], [0, 0, 1, 1], [], []>} : vector<16x64xf32>, vector<64x128xf32>, vector<16x128xf32> -> vector<16x128xf32>
    %11 = arith.addf %4, %10 : vector<16x128xf32>
    %c2 = arith.constant 2 : index
    %c0_12 = arith.constant 0 : index
    %c0_13 = arith.constant 0 : index
    %12 = vector.load %arg2[%c2, %c0_12, %c0_13] : memref<3x16x16xf32, #tpu.memory_space<vmem>>, vector<1x16x16xf32>
    %13 = vector.shape_cast %12 : vector<1x16x16xf32> to vector<16x16xf32>
    %cst_14 = arith.constant dense<0.000000e+00> : vector<16x64xf32>
    %14 = tpu.matmul %13, %1, %cst_14 {dimension_numbers = #tpu.dot_dimension_numbers<[1], [0], [0], [1], [0, 0, 1, 1], [], []>} : vector<16x16xf32>, vector<16x64xf32>, vector<16x64xf32> -> vector<16x64xf32>
    %c2_15 = arith.constant 2 : index
    %c0_16 = arith.constant 0 : index
    %c0_17 = arith.constant 0 : index
    %15 = vector.load %arg4[%c2_15, %c0_16, %c0_17] : memref<3x64x128xf32, #tpu.memory_space<vmem>>, vector<1x64x128xf32>
    %16 = vector.shape_cast %15 : vector<1x64x128xf32> to vector<64x128xf32>
    %cst_18 = arith.constant dense<0.000000e+00> : vector<16x128xf32>
    %17 = tpu.matmul %14, %16, %cst_18 {dimension_numbers = #tpu.dot_dimension_numbers<[1], [0], [0], [1], [0, 0, 1, 1], [], []>} : vector<16x64xf32>, vector<64x128xf32>, vector<16x128xf32> -> vector<16x128xf32>
    %18 = arith.addf %11, %17 : vector<16x128xf32>
    %c0_19 = arith.constant 0 : index
    %c0_20 = arith.constant 0 : index
    %19 = vector.load %arg7[%c0_19, %c0_20] : memref<1x128xf32, #tpu.memory_space<vmem>>, vector<1x128xf32>
    %20 = vector.broadcast %19 : vector<1x128xf32> to vector<16x128xf32>
    %21 = arith.addf %18, %20 : vector<16x128xf32>
    %cst_21 = arith.constant 0.000000e+00 : f32
    %22 = vector.broadcast %cst_21 : f32 to vector<16x128xf32>
    %23 = arith.maximumf %21, %22 : vector<16x128xf32>
    %c1_22 = arith.constant 1 : index
    %c0_23 = arith.constant 0 : index
    %c0_24 = arith.constant 0 : index
    %24 = vector.load %arg5[%c1_22, %c0_23, %c0_24] : memref<3x128x128xf32, #tpu.memory_space<vmem>>, vector<1x128x128xf32>
    %25 = vector.shape_cast %24 : vector<1x128x128xf32> to vector<128x128xf32>
    %cst_25 = arith.constant dense<0.000000e+00> : vector<16x128xf32>
    %26 = tpu.matmul %23, %25, %cst_25 {dimension_numbers = #tpu.dot_dimension_numbers<[1], [0], [0], [1], [0, 0, 1, 1], [], []>} : vector<16x128xf32>, vector<128x128xf32>, vector<16x128xf32> -> vector<16x128xf32>
    %c0_26 = arith.constant 0 : index
    %c0_27 = arith.constant 0 : index
    %c0_28 = arith.constant 0 : index
    %27 = vector.load %arg2[%c0_26, %c0_27, %c0_28] : memref<3x16x16xf32, #tpu.memory_space<vmem>>, vector<1x16x16xf32>
    %28 = vector.shape_cast %27 : vector<1x16x16xf32> to vector<16x16xf32>
    %cst_29 = arith.constant dense<0.000000e+00> : vector<16x128xf32>
    %29 = tpu.matmul %28, %23, %cst_29 {dimension_numbers = #tpu.dot_dimension_numbers<[1], [0], [0], [1], [0, 0, 1, 1], [], []>} : vector<16x16xf32>, vector<16x128xf32>, vector<16x128xf32> -> vector<16x128xf32>
    %c0_30 = arith.constant 0 : index
    %c0_31 = arith.constant 0 : index
    %c0_32 = arith.constant 0 : index
    %30 = vector.load %arg5[%c0_30, %c0_31, %c0_32] : memref<3x128x128xf32, #tpu.memory_space<vmem>>, vector<1x128x128xf32>
    %31 = vector.shape_cast %30 : vector<1x128x128xf32> to vector<128x128xf32>
    %cst_33 = arith.constant dense<0.000000e+00> : vector<16x128xf32>
    %32 = tpu.matmul %29, %31, %cst_33 {dimension_numbers = #tpu.dot_dimension_numbers<[1], [0], [0], [1], [0, 0, 1, 1], [], []>} : vector<16x128xf32>, vector<128x128xf32>, vector<16x128xf32> -> vector<16x128xf32>
    %33 = arith.addf %26, %32 : vector<16x128xf32>
    %c2_34 = arith.constant 2 : index
    %c0_35 = arith.constant 0 : index
    %c0_36 = arith.constant 0 : index
    %34 = vector.load %arg2[%c2_34, %c0_35, %c0_36] : memref<3x16x16xf32, #tpu.memory_space<vmem>>, vector<1x16x16xf32>
    %35 = vector.shape_cast %34 : vector<1x16x16xf32> to vector<16x16xf32>
    %cst_37 = arith.constant dense<0.000000e+00> : vector<16x128xf32>
    %36 = tpu.matmul %35, %23, %cst_37 {dimension_numbers = #tpu.dot_dimension_numbers<[1], [0], [0], [1], [0, 0, 1, 1], [], []>} : vector<16x16xf32>, vector<16x128xf32>, vector<16x128xf32> -> vector<16x128xf32>
    %c2_38 = arith.constant 2 : index
    %c0_39 = arith.constant 0 : index
    %c0_40 = arith.constant 0 : index
    %37 = vector.load %arg5[%c2_38, %c0_39, %c0_40] : memref<3x128x128xf32, #tpu.memory_space<vmem>>, vector<1x128x128xf32>
    %38 = vector.shape_cast %37 : vector<1x128x128xf32> to vector<128x128xf32>
    %cst_41 = arith.constant dense<0.000000e+00> : vector<16x128xf32>
    %39 = tpu.matmul %36, %38, %cst_41 {dimension_numbers = #tpu.dot_dimension_numbers<[1], [0], [0], [1], [0, 0, 1, 1], [], []>} : vector<16x128xf32>, vector<128x128xf32>, vector<16x128xf32> -> vector<16x128xf32>
    %40 = arith.addf %33, %39 : vector<16x128xf32>
    %c0_42 = arith.constant 0 : index
    %c0_43 = arith.constant 0 : index
    %41 = vector.load %arg8[%c0_42, %c0_43] : memref<1x128xf32, #tpu.memory_space<vmem>>, vector<1x128xf32>
    %42 = vector.broadcast %41 : vector<1x128xf32> to vector<16x128xf32>
    %43 = arith.addf %40, %42 : vector<16x128xf32>
    %cst_44 = arith.constant 0.000000e+00 : f32
    %44 = vector.broadcast %cst_44 : f32 to vector<16x128xf32>
    %45 = arith.maximumf %43, %44 : vector<16x128xf32>
    %c1_45 = arith.constant 1 : index
    %c0_46 = arith.constant 0 : index
    %c0_47 = arith.constant 0 : index
    %46 = vector.load %arg3[%c1_45, %c0_46, %c0_47] : memref<3x8x16xf32, #tpu.memory_space<vmem>>, vector<1x8x16xf32>
    %47 = vector.shape_cast %46 : vector<1x8x16xf32> to vector<8x16xf32>
    %cst_48 = arith.constant dense<0.000000e+00> : vector<8x128xf32>
    %48 = tpu.matmul %47, %45, %cst_48 {dimension_numbers = #tpu.dot_dimension_numbers<[1], [0], [0], [1], [0, 0, 1, 1], [], []>} : vector<8x16xf32>, vector<16x128xf32>, vector<8x128xf32> -> vector<8x128xf32>
    %c1_49 = arith.constant 1 : index
    %c0_50 = arith.constant 0 : index
    %c0_51 = arith.constant 0 : index
    %49 = vector.load %arg6[%c1_49, %c0_50, %c0_51] : memref<3x128x64xf32, #tpu.memory_space<vmem>>, vector<1x128x64xf32>
    %50 = vector.shape_cast %49 : vector<1x128x64xf32> to vector<128x64xf32>
    %cst_52 = arith.constant dense<0.000000e+00> : vector<8x64xf32>
    %51 = tpu.matmul %48, %50, %cst_52 {dimension_numbers = #tpu.dot_dimension_numbers<[1], [0], [0], [1], [0, 0, 1, 1], [], []>} : vector<8x128xf32>, vector<128x64xf32>, vector<8x64xf32> -> vector<8x64xf32>
    %c0_53 = arith.constant 0 : index
    %c0_54 = arith.constant 0 : index
    %c0_55 = arith.constant 0 : index
    %52 = vector.load %arg3[%c0_53, %c0_54, %c0_55] : memref<3x8x16xf32, #tpu.memory_space<vmem>>, vector<1x8x16xf32>
    %53 = vector.shape_cast %52 : vector<1x8x16xf32> to vector<8x16xf32>
    %cst_56 = arith.constant dense<0.000000e+00> : vector<8x128xf32>
    %54 = tpu.matmul %53, %45, %cst_56 {dimension_numbers = #tpu.dot_dimension_numbers<[1], [0], [0], [1], [0, 0, 1, 1], [], []>} : vector<8x16xf32>, vector<16x128xf32>, vector<8x128xf32> -> vector<8x128xf32>
    %c0_57 = arith.constant 0 : index
    %c0_58 = arith.constant 0 : index
    %c0_59 = arith.constant 0 : index
    %55 = vector.load %arg6[%c0_57, %c0_58, %c0_59] : memref<3x128x64xf32, #tpu.memory_space<vmem>>, vector<1x128x64xf32>
    %56 = vector.shape_cast %55 : vector<1x128x64xf32> to vector<128x64xf32>
    %cst_60 = arith.constant dense<0.000000e+00> : vector<8x64xf32>
    %57 = tpu.matmul %54, %56, %cst_60 {dimension_numbers = #tpu.dot_dimension_numbers<[1], [0], [0], [1], [0, 0, 1, 1], [], []>} : vector<8x128xf32>, vector<128x64xf32>, vector<8x64xf32> -> vector<8x64xf32>
    %58 = arith.addf %51, %57 : vector<8x64xf32>
    %c2_61 = arith.constant 2 : index
    %c0_62 = arith.constant 0 : index
    %c0_63 = arith.constant 0 : index
    %59 = vector.load %arg3[%c2_61, %c0_62, %c0_63] : memref<3x8x16xf32, #tpu.memory_space<vmem>>, vector<1x8x16xf32>
    %60 = vector.shape_cast %59 : vector<1x8x16xf32> to vector<8x16xf32>
    %cst_64 = arith.constant dense<0.000000e+00> : vector<8x128xf32>
    %61 = tpu.matmul %60, %45, %cst_64 {dimension_numbers = #tpu.dot_dimension_numbers<[1], [0], [0], [1], [0, 0, 1, 1], [], []>} : vector<8x16xf32>, vector<16x128xf32>, vector<8x128xf32> -> vector<8x128xf32>
    %c2_65 = arith.constant 2 : index
    %c0_66 = arith.constant 0 : index
    %c0_67 = arith.constant 0 : index
    %62 = vector.load %arg6[%c2_65, %c0_66, %c0_67] : memref<3x128x64xf32, #tpu.memory_space<vmem>>, vector<1x128x64xf32>
    %63 = vector.shape_cast %62 : vector<1x128x64xf32> to vector<128x64xf32>
    %cst_68 = arith.constant dense<0.000000e+00> : vector<8x64xf32>
    %64 = tpu.matmul %61, %63, %cst_68 {dimension_numbers = #tpu.dot_dimension_numbers<[1], [0], [0], [1], [0, 0, 1, 1], [], []>} : vector<8x128xf32>, vector<128x64xf32>, vector<8x64xf32> -> vector<8x64xf32>
    %65 = arith.addf %58, %64 : vector<8x64xf32>
    %c0_69 = arith.constant 0 : index
    %c0_70 = arith.constant 0 : index
    %66 = vector.load %arg9[%c0_69, %c0_70] : memref<1x64xf32, #tpu.memory_space<vmem>>, vector<1x64xf32>
    %67 = vector.broadcast %66 : vector<1x64xf32> to vector<8x64xf32>
    %68 = arith.addf %65, %67 : vector<8x64xf32>
    %cst_71 = arith.constant 0.000000e+00 : f32
    %69 = vector.broadcast %cst_71 : f32 to vector<8x64xf32>
    %70 = arith.maximumf %68, %69 : vector<8x64xf32>
    %c0_72 = arith.constant 0 : index
    %c0_73 = arith.constant 0 : index
    %c0_74 = arith.constant 0 : index
    %71 = vector.load %arg10[%c0_72, %c0_73, %c0_74] : memref<1x16x128xf32, #tpu.memory_space<vmem>>, vector<1x16x128xf32>
    %72 = vector.shape_cast %71 : vector<1x16x128xf32> to vector<16x128xf32>
    %73 = vector.shape_cast %45 : vector<16x128xf32> to vector<1x16x128xf32>
    tpu.vector_store %arg10[%c0_72, %c0_73, %c0_74], %73 {strides = array<i32>} : memref<1x16x128xf32, #tpu.memory_space<vmem>>, vector<1x16x128xf32>,
    %c0_75 = arith.constant 0 : index
    %c0_76 = arith.constant 0 : index
    %c0_77 = arith.constant 0 : index
    %74 = vector.load %arg11[%c0_75, %c0_76, %c0_77] : memref<1x8x64xf32, #tpu.memory_space<vmem>>, vector<1x8x64xf32>
    %75 = vector.shape_cast %74 : vector<1x8x64xf32> to vector<8x64xf32>
    %76 = vector.shape_cast %70 : vector<8x64xf32> to vector<1x8x64xf32>
    tpu.vector_store %arg11[%c0_75, %c0_76, %c0_77], %76 {strides = array<i32>} : memref<1x8x64xf32, #tpu.memory_space<vmem>>, vector<1x8x64xf32>,
    return
  }
  func.func @transform_0(%arg0: i32) -> (i32, i32, i32) {
    %c0_i32 = arith.constant 0 : i32
    %c0_i32_0 = arith.constant 0 : i32
    %c0_i32_1 = arith.constant 0 : i32
    return %arg0, %c0_i32, %c0_i32_0 : i32, i32, i32
  }
  func.func @transform_1(%arg0: i32) -> (i32, i32, i32) {
    %c0_i32 = arith.constant 0 : i32
    %c0_i32_0 = arith.constant 0 : i32
    %c0_i32_1 = arith.constant 0 : i32
    %c0_i32_2 = arith.constant 0 : i32
    return %c0_i32, %c0_i32_0, %c0_i32_1 : i32, i32, i32
  }
  func.func @transform_2(%arg0: i32) -> (i32, i32, i32) {
    %c0_i32 = arith.constant 0 : i32
    %c0_i32_0 = arith.constant 0 : i32
    %c0_i32_1 = arith.constant 0 : i32
    %c0_i32_2 = arith.constant 0 : i32
    return %c0_i32, %c0_i32_0, %c0_i32_1 : i32, i32, i32
  }
  func.func @transform_3(%arg0: i32) -> (i32, i32, i32) {
    %c0_i32 = arith.constant 0 : i32
    %c0_i32_0 = arith.constant 0 : i32
    %c0_i32_1 = arith.constant 0 : i32
    %c0_i32_2 = arith.constant 0 : i32
    return %c0_i32, %c0_i32_0, %c0_i32_1 : i32, i32, i32
  }
  func.func @transform_4(%arg0: i32) -> (i32, i32, i32) {
    %c0_i32 = arith.constant 0 : i32
    %c0_i32_0 = arith.constant 0 : i32
    %c0_i32_1 = arith.constant 0 : i32
    %c0_i32_2 = arith.constant 0 : i32
    return %c0_i32, %c0_i32_0, %c0_i32_1 : i32, i32, i32
  }
  func.func @transform_5(%arg0: i32) -> (i32, i32, i32) {
    %c0_i32 = arith.constant 0 : i32
    %c0_i32_0 = arith.constant 0 : i32
    %c0_i32_1 = arith.constant 0 : i32
    %c0_i32_2 = arith.constant 0 : i32
    return %c0_i32, %c0_i32_0, %c0_i32_1 : i32, i32, i32
  }
  func.func @transform_6(%arg0: i32) -> (i32, i32) {
    %c0_i32 = arith.constant 0 : i32
    %c0_i32_0 = arith.constant 0 : i32
    %c0_i32_1 = arith.constant 0 : i32
    return %c0_i32, %c0_i32_0 : i32, i32
  }
  func.func @transform_7(%arg0: i32) -> (i32, i32) {
    %c0_i32 = arith.constant 0 : i32
    %c0_i32_0 = arith.constant 0 : i32
    %c0_i32_1 = arith.constant 0 : i32
    return %c0_i32, %c0_i32_0 : i32, i32
  }
  func.func @transform_8(%arg0: i32) -> (i32, i32) {
    %c0_i32 = arith.constant 0 : i32
    %c0_i32_0 = arith.constant 0 : i32
    %c0_i32_1 = arith.constant 0 : i32
    return %c0_i32, %c0_i32_0 : i32, i32
  }
  func.func @transform_9(%arg0: i32) -> (i32, i32, i32) {
    %c0_i32 = arith.constant 0 : i32
    %c0_i32_0 = arith.constant 0 : i32
    %c0_i32_1 = arith.constant 0 : i32
    return %arg0, %c0_i32, %c0_i32_0 : i32, i32, i32
  }
  func.func @transform_10(%arg0: i32) -> (i32, i32, i32) {
    %c0_i32 = arith.constant 0 : i32
    %c0_i32_0 = arith.constant 0 : i32
    %c0_i32_1 = arith.constant 0 : i32
    return %arg0, %c0_i32, %c0_i32_0 : i32, i32, i32
  }
}

</mosaic_0001>

<llo_original>
// kernel: tpu_custom_call.1
$region0: #{tpu_custom_call.1}
  #allocation0 [shape = 'u32[]', space=smem, size = 0x4, offset = 0x4, fixed_abs, tag = 'smem constant byte address 0x4 - core index']
  #allocation1 [shape = 'u32[72,128]{1,0:T(1,128)}', space=vmem, size = 0x9000, scoped, tag = 'internal scratch']
  %s0 = inlined_call_operand.hbm [shape: f32[2,16,64], index: 0, kind: input, shape index: {}]
  %s1 = inlined_call_operand.hbm [shape: f32[3,16,16], index: 1, kind: input, shape index: {}]
  %s2 = inlined_call_operand.hbm [shape: f32[3,8,16], index: 2, kind: input, shape index: {}]
  %s3 = inlined_call_operand.vmem [shape: f32[3,64,128], index: 3, kind: input, shape index: {}]
  %s4 = inlined_call_operand.vmem [shape: f32[3,128,128], index: 4, kind: input, shape index: {}]
  %s5 = inlined_call_operand.vmem [shape: f32[3,128,64], index: 5, kind: input, shape index: {}]
  %s6 = inlined_call_operand.vmem [shape: f32[1,128], index: 6, kind: input, shape index: {}]
  %s7 = inlined_call_operand.vmem [shape: f32[1,128], index: 7, kind: input, shape index: {}]
  %s8 = inlined_call_operand.vmem [shape: f32[1,64], index: 8, kind: input, shape index: {}]
  %s9 = inlined_call_operand.hbm [shape: f32[2,16,128], index: 9, kind: output, shape index: {0}]
  %s10 = inlined_call_operand.hbm [shape: f32[2,8,64], index: 10, kind: output, shape index: {1}]
  %11 = xla_tuple %s9, %s10
  %s12 = sld [smem:[#allocation0]]
  $region89: #{tpu_custom_call.1} parent=0
    _
  %s14 = ssub.s32 1, %s12
  %s15 = scalar_select 0, %s14, %s12
  $region1: #{tpu_custom_call.1} parent=0
    #allocation2 [shape = 'u8[16384]{0}', space=vmem, size = 0x4000, scoped, tag = 'input window, operand 0']
    #allocation3 [shape = 's32[2]{0}', space=sflag, size = 0x8, scoped, tag = 'scoped memory for tpu_custom_call.1']
    #allocation4 [shape = 's32[2]{0}', space=sflag, size = 0x8, scoped, tag = 'scoped memory for tpu_custom_call.1']
    #allocation5 [shape = 'u8[24576]{0}', space=vmem, size = 0x6000, scoped, tag = 'input window, operand 1, single buffered']
    #allocation6 [shape = 's32[1]{0}', space=sflag, size = 0x4, scoped, tag = 'scoped memory for tpu_custom_call.1']
    #allocation7 [shape = 'u8[12288]{0}', space=vmem, size = 0x3000, scoped, tag = 'input window, operand 2, single buffered']
    #allocation8 [shape = 'u8[16384]{0}', space=vmem, size = 0x4000, scoped, tag = 'output window, operand 0']
    #allocation9 [shape = 'u8[8192]{0}', space=vmem, size = 0x2000, scoped, tag = 'output window, operand 1']
    #allocation10 [shape = 's32[2]{0}', space=sflag, size = 0x8, scoped, tag = 'scoped memory for tpu_custom_call.1']
    %16 = vsyncpa [#allocation3], 0
    %s17 = scalar_lea.sflag [#allocation3], 1
    %18 = vsyncpa %s17, 0
    %19 = vsyncpa [#allocation6], 0
    %20 = vsyncpa [#allocation4], 0
    %s21 = scalar_lea.sflag [#allocation4], 1
    %22 = vsyncpa %s21, 0
    %23 = vsyncpa [#allocation10], 0
    %s24 = scalar_lea.sflag [#allocation10], 1
    %25 = vsyncpa %s24, 0
    loop: start=0, step=1, limit=4
    $region2: #{tpu_custom_call.1} parent=1 // loop_pre_header
      _
    $region3: #{tpu_custom_call.1} parent=1 // loop_header
      %s27 = sphi 0, %s31
      %p28 = scmp.ge.s32.totalorder %s27, 4
      %s37 = sphi 0, %s39
      %s40 = sphi 0, %s37
      %s41 = sphi 0, %s40
      %s57 = sphi 0, %s41
      %s61 = sphi 0, %s61
      %s63 = sphi 0, %s61
      %s64 = sphi 0, %s63
      %s78 = sphi 0, %s64
      %s82 = sphi 0, %s82
      %s84 = sphi 0, %s82
      %s85 = sphi 0, %s84
      %s99 = sphi 0, %s85
      %s103 = sphi 0, %s103
      %s105 = sphi 0, %s103
      %s106 = sphi 0, %s105
      %s120 = sphi 0, %s106
      %s124 = sphi 0, %s124
      %s126 = sphi 0, %s124
      %s127 = sphi 0, %s126
      %s141 = sphi 0, %s127
      %s145 = sphi 0, %s145
      %s147 = sphi 0, %s145
      %s148 = sphi 0, %s147
      %s162 = sphi 0, %s148
      %s166 = sphi 0, %s166
      %s168 = sphi 0, %s166
      %s169 = sphi 0, %s168
      %s183 = sphi 0, %s169
      %s187 = sphi 0, %s187
      %s189 = sphi 0, %s187
      %s190 = sphi 0, %s189
      %s204 = sphi 0, %s190
      %s208 = sphi 0, %s208
      %s210 = sphi 0, %s208
      %s211 = sphi 0, %s210
      %s225 = sphi 0, %s211
      %s231 = sphi 0, %s233
      %s234 = sphi 0, %s231
      %s235 = sphi 0, %s234
      %s251 = sphi 0, %s235
      %s257 = sphi 0, %s259
      %s260 = sphi 0, %s257
      %s261 = sphi 0, %s260
      %s277 = sphi 0, %s261
    $region4: #{tpu_custom_call.1} parent=1 // loop_header_branch
      %30 = sbr.rel (%p28) target = $region8
    $region5: #{tpu_custom_call.1} parent=1 // loop_body
      %s32 = ssub.s32 %s27, 1
      %s33 = ssub.s32 %s27, 2
      %s34 = sadd.s32 %s27, 1
      %s35 = ssub.s32 %s27, %s34
      %p36 = scmp.eq.s32.totalorder %s35, 0
      %s38 = sadd.s32 %s37, 1
      %s39 = scalar_select %p36, %s37, %s38
      %p42 = pneg %p36
      %p43 = scmp.eq.s32.totalorder %s27, 1
      %p44 = por %p42, %p43
      %p45 = scmp.ne.s32.totalorder %s37, %s40
      %p46 = scmp.eq.s32.totalorder %s27, 0
      %p47 = por %p45, %p46
      %p48 = scmp.ne.s32.totalorder %s37, %s40
      %p49 = scmp.eq.s32.totalorder %s32, 1
      %p50 = por %p48, %p49
      %p51 = scmp.ne.s32.totalorder %s40, %s41
      %p52 = scmp.eq.s32.totalorder %s32, 0
      %p53 = por %p51, %p52
      %p54 = scmp.ne.s32.totalorder %s40, %s41
      %p55 = scmp.eq.s32.totalorder %s33, 1
      %p56 = por %p54, %p55
      %p58 = scmp.ne.s32.totalorder %s41, %s57
      %p59 = scmp.eq.s32.totalorder %s33, 0
      %p60 = por %p58, %p59
      %s62 = sadd.s32 %s61, 1
      %p65 = scmp.eq.s32.totalorder %s27, 1
      %p66 = scmp.ne.s32.totalorder %s61, %s63
      %p67 = scmp.eq.s32.totalorder %s27, 0
      %p68 = por %p66, %p67
      %p69 = scmp.ne.s32.totalorder %s61, %s63
      %p70 = scmp.eq.s32.totalorder %s32, 1
      %p71 = por %p69, %p70
      %p72 = scmp.ne.s32.totalorder %s63, %s64
      %p73 = scmp.eq.s32.totalorder %s32, 0
      %p74 = por %p72, %p73
      %p75 = scmp.ne.s32.totalorder %s63, %s64
      %p76 = scmp.eq.s32.totalorder %s33, 1
      %p77 = por %p75, %p76
      %p79 = scmp.ne.s32.totalorder %s64, %s78
      %p80 = scmp.eq.s32.totalorder %s33, 0
      %p81 = por %p79, %p80
      %s83 = sadd.s32 %s82, 1
      %p86 = scmp.eq.s32.totalorder %s27, 1
      %p87 = scmp.ne.s32.totalorder %s82, %s84
      %p88 = scmp.eq.s32.totalorder %s27, 0
      %p89 = por %p87, %p88
      %p90 = scmp.ne.s32.totalorder %s82, %s84
      %p91 = scmp.eq.s32.totalorder %s32, 1
      %p92 = por %p90, %p91
      %p93 = scmp.ne.s32.totalorder %s84, %s85
      %p94 = scmp.eq.s32.totalorder %s32, 0
      %p95 = por %p93, %p94
      %p96 = scmp.ne.s32.totalorder %s84, %s85
      %p97 = scmp.eq.s32.totalorder %s33, 1
      %p98 = por %p96, %p97
      %p100 = scmp.ne.s32.totalorder %s85, %s99
      %p101 = scmp.eq.s32.totalorder %s33, 0
      %p102 = por %p100, %p101
      %s104 = sadd.s32 %s103, 1
      %p107 = scmp.eq.s32.totalorder %s27, 1
      %p108 = scmp.ne.s32.totalorder %s103, %s105
      %p109 = scmp.eq.s32.totalorder %s27, 0
      %p110 = por %p108, %p109
      %p111 = scmp.ne.s32.totalorder %s103, %s105
      %p112 = scmp.eq.s32.totalorder %s32, 1
      %p113 = por %p111, %p112
      %p114 = scmp.ne.s32.totalorder %s105, %s106
      %p115 = scmp.eq.s32.totalorder %s32, 0
      %p116 = por %p114, %p115
      %p117 = scmp.ne.s32.totalorder %s105, %s106
      %p118 = scmp.eq.s32.totalorder %s33, 1
      %p119 = por %p117, %p118
      %p121 = scmp.ne.s32.totalorder %s106, %s120
      %p122 = scmp.eq.s32.totalorder %s33, 0
      %p123 = por %p121, %p122
      %s125 = sadd.s32 %s124, 1
      %p128 = scmp.eq.s32.totalorder %s27, 1
      %p129 = scmp.ne.s32.totalorder %s124, %s126
      %p130 = scmp.eq.s32.totalorder %s27, 0
      %p131 = por %p129, %p130
      %p132 = scmp.ne.s32.totalorder %s124, %s126
      %p133 = scmp.eq.s32.totalorder %s32, 1
      %p134 = por %p132, %p133
      %p135 = scmp.ne.s32.totalorder %s126, %s127
      %p136 = scmp.eq.s32.totalorder %s32, 0
      %p137 = por %p135, %p136
      %p138 = scmp.ne.s32.totalorder %s126, %s127
      %p139 = scmp.eq.s32.totalorder %s33, 1
      %p140 = por %p138, %p139
      %p142 = scmp.ne.s32.totalorder %s127, %s141
      %p143 = scmp.eq.s32.totalorder %s33, 0
      %p144 = por %p142, %p143
      %s146 = sadd.s32 %s145, 1
      %p149 = scmp.eq.s32.totalorder %s27, 1
      %p150 = scmp.ne.s32.totalorder %s145, %s147
      %p151 = scmp.eq.s32.totalorder %s27, 0
      %p152 = por %p150, %p151
      %p153 = scmp.ne.s32.totalorder %s145, %s147
      %p154 = scmp.eq.s32.totalorder %s32, 1
      %p155 = por %p153, %p154
      %p156 = scmp.ne.s32.totalorder %s147, %s148
      %p157 = scmp.eq.s32.totalorder %s32, 0
      %p158 = por %p156, %p157
      %p159 = scmp.ne.s32.totalorder %s147, %s148
      %p160 = scmp.eq.s32.totalorder %s33, 1
      %p161 = por %p159, %p160
      %p163 = scmp.ne.s32.totalorder %s148, %s162
      %p164 = scmp.eq.s32.totalorder %s33, 0
      %p165 = por %p163, %p164
      %s167 = sadd.s32 %s166, 1
      %p170 = scmp.eq.s32.totalorder %s27, 1
      %p171 = scmp.ne.s32.totalorder %s166, %s168
      %p172 = scmp.eq.s32.totalorder %s27, 0
      %p173 = por %p171, %p172
      %p174 = scmp.ne.s32.totalorder %s166, %s168
      %p175 = scmp.eq.s32.totalorder %s32, 1
      %p176 = por %p174, %p175
      %p177 = scmp.ne.s32.totalorder %s168, %s169
      %p178 = scmp.eq.s32.totalorder %s32, 0
      %p179 = por %p177, %p178
      %p180 = scmp.ne.s32.totalorder %s168, %s169
      %p181 = scmp.eq.s32.totalorder %s33, 1
      %p182 = por %p180, %p181
      %p184 = scmp.ne.s32.totalorder %s169, %s183
      %p185 = scmp.eq.s32.totalorder %s33, 0
      %p186 = por %p184, %p185
      %s188 = sadd.s32 %s187, 1
      %p191 = scmp.eq.s32.totalorder %s27, 1
      %p192 = scmp.ne.s32.totalorder %s187, %s189
      %p193 = scmp.eq.s32.totalorder %s27, 0
      %p194 = por %p192, %p193
      %p195 = scmp.ne.s32.totalorder %s187, %s189
      %p196 = scmp.eq.s32.totalorder %s32, 1
      %p197 = por %p195, %p196
      %p198 = scmp.ne.s32.totalorder %s189, %s190
      %p199 = scmp.eq.s32.totalorder %s32, 0
      %p200 = por %p198, %p199
      %p201 = scmp.ne.s32.totalorder %s189, %s190
      %p202 = scmp.eq.s32.totalorder %s33, 1
      %p203 = por %p201, %p202
      %p205 = scmp.ne.s32.totalorder %s190, %s204
      %p206 = scmp.eq.s32.totalorder %s33, 0
      %p207 = por %p205, %p206
      %s209 = sadd.s32 %s208, 1
      %p212 = scmp.eq.s32.totalorder %s27, 1
      %p213 = scmp.ne.s32.totalorder %s208, %s210
      %p214 = scmp.eq.s32.totalorder %s27, 0
      %p215 = por %p213, %p214
      %p216 = scmp.ne.s32.totalorder %s208, %s210
      %p217 = scmp.eq.s32.totalorder %s32, 1
      %p218 = por %p216, %p217
      %p219 = scmp.ne.s32.totalorder %s210, %s211
      %p220 = scmp.eq.s32.totalorder %s32, 0
      %p221 = por %p219, %p220
      %p222 = scmp.ne.s32.totalorder %s210, %s211
      %p223 = scmp.eq.s32.totalorder %s33, 1
      %p224 = por %p222, %p223
      %p226 = scmp.ne.s32.totalorder %s211, %s225
      %p227 = scmp.eq.s32.totalorder %s33, 0
      %p228 = por %p226, %p227
      %s229 = ssub.s32 %s27, %s34
      %p230 = scmp.eq.s32.totalorder %s229, 0
      %s232 = sadd.s32 %s231, 1
      %s233 = scalar_select %p230, %s231, %s232
      %p236 = pneg %p230
      %p237 = scmp.eq.s32.totalorder %s27, 1
      %p238 = por %p236, %p237
      %p239 = scmp.ne.s32.totalorder %s231, %s234
      %p240 = scmp.eq.s32.totalorder %s27, 0
      %p241 = por %p239, %p240
      %p242 = scmp.ne.s32.totalorder %s231, %s234
      %p243 = scmp.eq.s32.totalorder %s32, 1
      %p244 = por %p242, %p243
      %p245 = scmp.ne.s32.totalorder %s234, %s235
      %p246 = scmp.eq.s32.totalorder %s32, 0
      %p247 = por %p245, %p246
      %p248 = scmp.ne.s32.totalorder %s234, %s235
      %p249 = scmp.eq.s32.totalorder %s33, 1
      %p250 = por %p248, %p249
      %p252 = scmp.ne.s32.totalorder %s235, %s251
      %p253 = scmp.eq.s32.totalorder %s33, 0
      %p254 = por %p252, %p253
      %s255 = ssub.s32 %s27, %s34
      %p256 = scmp.eq.s32.totalorder %s255, 0
      %s258 = sadd.s32 %s257, 1
      %s259 = scalar_select %p256, %s257, %s258
      %p262 = pneg %p256
      %p263 = scmp.eq.s32.totalorder %s27, 1
      %p264 = por %p262, %p263
      %p265 = scmp.ne.s32.totalorder %s257, %s260
      %p266 = scmp.eq.s32.totalorder %s27, 0
      %p267 = por %p265, %p266
      %p268 = scmp.ne.s32.totalorder %s257, %s260
      %p269 = scmp.eq.s32.totalorder %s32, 1
      %p270 = por %p268, %p269
      %p271 = scmp.ne.s32.totalorder %s260, %s261
      %p272 = scmp.eq.s32.totalorder %s32, 0
      %p273 = por %p271, %p272
      %p274 = scmp.ne.s32.totalorder %s260, %s261
      %p275 = scmp.eq.s32.totalorder %s33, 1
      %p276 = por %p274, %p275
      %p278 = scmp.ne.s32.totalorder %s261, %s277
      %p279 = scmp.eq.s32.totalorder %s33, 0
      %p280 = por %p278, %p279
      %p281 = scmp.le.s32.totalorder 1, %s27
      %p282 = scmp.lt.s32.totalorder %s27, 3
      %p283 = pnand %p281, %p282
      %p284 = pneg %p283
      // Predicated region
      $region9: #{tpu_custom_call.1} parent=5 // pred_check
        _
      $region10: #{tpu_custom_call.1} parent=5 // pred_check_branch
        %286 = sbr.rel (%p283) target = $region12
      $region11: #{tpu_custom_call.1} parent=5 // pred_region
        %s287 = ssub.s32 %s27, 1
        // Predicated region
        $region13: #{tpu_custom_call.1} parent=11 // pred_check
          %p288 = pneg %p74
        $region14: #{tpu_custom_call.1} parent=11 // pred_check_branch
          %290 = sbr.rel (%p288) target = $region16
        $region15: #{tpu_custom_call.1} parent=11 // pred_region
          %292 = vsyncadd [#allocation6], 0
          %s293 = sshll.u32 %s1, 4
          %s294 = int_to_ptr.hbm [resolvable:$true] %s293
          %s295 = sshll.u32 [#allocation5], 4
          %s296 = int_to_ptr.vmem [resolvable:$true] %s295
          %301 = dma.hbm_to_vmem [thread:$0]  %s294, 768, %s296, [#allocation6], 128, 128, 8
        $region16: #{tpu_custom_call.1} parent=11 // pred_fallthru
          _
        // Predicated region
        $region17: #{tpu_custom_call.1} parent=11 // pred_check
          %p302 = pneg %p95
        $region18: #{tpu_custom_call.1} parent=11 // pred_check_branch
          %304 = sbr.rel (%p302) target = $region20
        $region19: #{tpu_custom_call.1} parent=11 // pred_region
          %306 = vsyncadd [#allocation6], 0
          %s307 = sshll.u32 %s2, 4
          %s308 = int_to_ptr.hbm [resolvable:$true] %s307
          %s309 = sshll.u32 [#allocation7], 4
          %s310 = int_to_ptr.vmem [resolvable:$true] %s309
          %315 = dma.hbm_to_vmem [thread:$0]  %s308, 384, %s310, [#allocation6], 128, 128, 8
        $region20: #{tpu_custom_call.1} parent=11 // pred_fallthru
          _
        // Predicated region
        $region21: #{tpu_custom_call.1} parent=11 // pred_check
          %p316 = pneg %p116
        $region22: #{tpu_custom_call.1} parent=11 // pred_check_branch
          %318 = sbr.rel (%p316) target = $region24
        $region23: #{tpu_custom_call.1} parent=11 // pred_region
          _
        $region24: #{tpu_custom_call.1} parent=11 // pred_fallthru
          _
        // Predicated region
        $region25: #{tpu_custom_call.1} parent=11 // pred_check
          %p319 = pneg %p137
        $region26: #{tpu_custom_call.1} parent=11 // pred_check_branch
          %321 = sbr.rel (%p319) target = $region28
        $region27: #{tpu_custom_call.1} parent=11 // pred_region
          _
        $region28: #{tpu_custom_call.1} parent=11 // pred_fallthru
          _
        // Predicated region
        $region29: #{tpu_custom_call.1} parent=11 // pred_check
          %p322 = pneg %p158
        $region30: #{tpu_custom_call.1} parent=11 // pred_check_branch
          %324 = sbr.rel (%p322) target = $region32
        $region31: #{tpu_custom_call.1} parent=11 // pred_region
          _
        $region32: #{tpu_custom_call.1} parent=11 // pred_fallthru
          _
        // Predicated region
        $region33: #{tpu_custom_call.1} parent=11 // pred_check
          %p325 = pneg %p179
        $region34: #{tpu_custom_call.1} parent=11 // pred_check_branch
          %327 = sbr.rel (%p325) target = $region36
        $region35: #{tpu_custom_call.1} parent=11 // pred_region
          _
        $region36: #{tpu_custom_call.1} parent=11 // pred_fallthru
          _
        // Predicated region
        $region37: #{tpu_custom_call.1} parent=11 // pred_check
          %p328 = pneg %p200
        $region38: #{tpu_custom_call.1} parent=11 // pred_check_branch
          %330 = sbr.rel (%p328) target = $region40
        $region39: #{tpu_custom_call.1} parent=11 // pred_region
          _
        $region40: #{tpu_custom_call.1} parent=11 // pred_fallthru
          _
        // Predicated region
        $region41: #{tpu_custom_call.1} parent=11 // pred_check
          %p331 = pneg %p221
        $region42: #{tpu_custom_call.1} parent=11 // pred_check_branch
          %333 = sbr.rel (%p331) target = $region44
        $region43: #{tpu_custom_call.1} parent=11 // pred_region
          _
        $region44: #{tpu_custom_call.1} parent=11 // pred_fallthru
          _
      $region12: #{tpu_custom_call.1} parent=5 // pred_fallthru
        _
      %p334 = scmp.lt.s32.totalorder %s27, 2
      // Predicated region
      $region45: #{tpu_custom_call.1} parent=5 // pred_check
        %p335 = pneg %p334
      $region46: #{tpu_custom_call.1} parent=5 // pred_check_branch
        %337 = sbr.rel (%p335) target = $region48
      $region47: #{tpu_custom_call.1} parent=5 // pred_region
        // Predicated region
        $region49: #{tpu_custom_call.1} parent=47 // pred_check
          %p338 = pneg %p47
        $region50: #{tpu_custom_call.1} parent=47 // pred_check_branch
          %340 = sbr.rel (%p338) target = $region52
        $region51: #{tpu_custom_call.1} parent=47 // pred_region
          %s341 = sand.u32 %s37, 1
          %s342 = scalar_lea.sflag [#allocation3], %s341
          %s343 = sand.u32 %s37, 1
          %s344 = smul.addr %s343, 16
          %s345 = scalar_lea.vmem [#allocation2], %s344
          %347 = vsyncadd %s342, 0
          %s348 = smul.addr %s27, 2
          %s349 = smul.addr %s348, 8
          %s350 = scalar_lea.hbm %s0, %s349
          %s351 = sshll.u32 %s350, 4
          %s352 = int_to_ptr.hbm [resolvable:$true] %s351
          %s353 = sshll.u32 %s345, 4
          %s354 = int_to_ptr.vmem [resolvable:$true] %s353
          %359 = dma.hbm_to_vmem [thread:$0]  %s352, 256, %s354, %s342, 128, 128, 8
        $region52: #{tpu_custom_call.1} parent=47 // pred_fallthru
          _
      $region48: #{tpu_custom_call.1} parent=5 // pred_fallthru
        _
      %p360 = scmp.le.s32.totalorder 1, %s27
      %p361 = scmp.lt.s32.totalorder %s27, 3
      %p362 = pnand %p360, %p361
      %p363 = pneg %p362
      // Predicated region
      $region53: #{tpu_custom_call.1} parent=5 // pred_check
        _
      $region54: #{tpu_custom_call.1} parent=5 // pred_check_branch
        %365 = sbr.rel (%p362) target = $region56
      $region55: #{tpu_custom_call.1} parent=5 // pred_region
        %s366 = ssub.s32 %s27, 1
        %s367 = sand.u32 %s40, 1
        %s368 = scalar_lea.sflag [#allocation3], %s367
        %s369 = sand.u32 %s40, 1
        %s370 = smul.addr %s369, 16
        %s371 = scalar_lea.vmem [#allocation2], %s370
        // Predicated region
        $region57: #{tpu_custom_call.1} parent=55 // pred_check
          %p372 = pneg %p53
        $region58: #{tpu_custom_call.1} parent=55 // pred_check_branch
          %374 = sbr.rel (%p372) target = $region60
        $region59: #{tpu_custom_call.1} parent=55 // pred_region
          %376 = dma.done %s368, 256
        $region60: #{tpu_custom_call.1} parent=55 // pred_fallthru
          _
        // Predicated region
        $region61: #{tpu_custom_call.1} parent=55 // pred_check
          %p377 = pneg %p74
        $region62: #{tpu_custom_call.1} parent=55 // pred_check_branch
          %379 = sbr.rel (%p377) target = $region64
        $region63: #{tpu_custom_call.1} parent=55 // pred_region
          %381 = dma.done [#allocation6], 768
        $region64: #{tpu_custom_call.1} parent=55 // pred_fallthru
          _
        // Predicated region
        $region65: #{tpu_custom_call.1} parent=55 // pred_check
          %p382 = pneg %p95
        $region66: #{tpu_custom_call.1} parent=55 // pred_check_branch
          %384 = sbr.rel (%p382) target = $region68
        $region67: #{tpu_custom_call.1} parent=55 // pred_region
          %386 = dma.done [#allocation6], 384
        $region68: #{tpu_custom_call.1} parent=55 // pred_fallthru
          _
        %s387 = sand.u32 %s40, 1
        %s388 = scalar_lea.sflag [#allocation3], %s387
        %s389 = sand.u32 %s40, 1
        %s390 = smul.addr %s389, 16
        %s391 = scalar_lea.vmem [#allocation2], %s390
        %p392 = pneg %p53
        %p393 = pneg %p50
        %p394 = pneg %p74
        %p395 = pneg %p71
        %p396 = pneg %p95
        %p397 = pneg %p92
        %p398 = pneg %p116
        %p399 = pneg %p113
        %p400 = pneg %p137
        %p401 = pneg %p134
        %p402 = pneg %p158
        %p403 = pneg %p155
        %p404 = pneg %p179
        %p405 = pneg %p176
        %p406 = pneg %p200
        %p407 = pneg %p197
        %p408 = pneg %p221
        %p409 = pneg %p218
        %p410 = pneg %p247
        %p411 = pneg %p244
        %s412 = sand.u32 %s234, 1
        %s413 = scalar_lea.sflag [#allocation4], %s412
        %s414 = sand.u32 %s234, 1
        %s415 = smul.addr %s414, 16
        %s416 = scalar_lea.vmem [#allocation8], %s415
        %p417 = pneg %p273
        %p418 = pneg %p270
        %s419 = sand.u32 %s260, 1
        %s420 = scalar_lea.sflag [#allocation10], %s419
        %s421 = sand.u32 %s260, 1
        %s422 = smul.addr %s421, 8
        %s423 = scalar_lea.vmem [#allocation9], %s422
        %v424 = vld [vmem:[%s371] sm:$0xff]
        %v425 = vld [vmem:[%s371 + $0x8] sm:$0xff]
        %s426 = scalar_lea.vmem %s3, 64
        %v427 = vld [vmem:[%s426] sm:$0xff]
        %v428 = vld [vmem:[%s426 + $0x8] sm:$0xff]
        %v429 = vld [vmem:[%s426 + $0x10] sm:$0xff]
        %v430 = vld [vmem:[%s426 + $0x18] sm:$0xff]
        %v431 = vld [vmem:[%s426 + $0x20] sm:$0xff]
        %v432 = vld [vmem:[%s426 + $0x28] sm:$0xff]
        %v433 = vld [vmem:[%s426 + $0x30] sm:$0xff]
        %v434 = vld [vmem:[%s426 + $0x38] sm:$0xff]
        %v435 = vld [vmem:[#allocation5] sm:$0xff]
        %v436 = vld [vmem:[#allocation5 + $0x8] sm:$0xff]
        %vm437 = vcmask 130048
        %v439 = vsel %vm437, %v435, 0
        %v442 = vsel %vm437, %v436, 0
        %444 = vmatpush.msra.mxu0 0.0
        %445 = vmatpush.msra.mxu0 0.0
        %446 = vmatpush.msra.mxu0 0.0
        %447 = vmatpush.msra.mxu0 0.0
        %448 = vmatpush.msra.mxu0 0.0
        %449 = vmatpush.msra.mxu0 0.0
        %450 = vmatpush.msra.mxu0 0.0
        %451 = vmatpush.msra.mxu0 0.0
        %452 = vmatpush.msra.mxu0 0.0
        %453 = vmatpush.msra.mxu0 0.0
        %454 = vmatpush.msra.mxu0 0.0
        %455 = vmatpush.msra.mxu0 0.0
        %456 = vmatpush.msra.mxu0 0.0
        %457 = vmatpush.msra.mxu0 0.0
        %458 = vmatpush.msra.mxu0 %v425
        %459 = vmatpush.msra.mxu0 %v424
        %460 = vmatmul.f32.gmra.mxu0 %v439
        %v461 = vpop.f32.mrf.mxu0
        %v462 = vadd.f32 0.0, %v461
        %463 = vmatmul.f32.gmra.mxu0 %v442
        %v464 = vpop.f32.mrf.mxu0
        %v465 = vadd.f32 0.0, %v464
        %466 = vdwg.mxu0
        %v467 = vld [vmem:[%s3] sm:$0xff]
        %v468 = vld [vmem:[%s3 + $0x8] sm:$0xff]
        %v469 = vld [vmem:[%s3 + $0x10] sm:$0xff]
        %v470 = vld [vmem:[%s3 + $0x18] sm:$0xff]
        %v471 = vld [vmem:[%s3 + $0x20] sm:$0xff]
        %v472 = vld [vmem:[%s3 + $0x28] sm:$0xff]
        %v473 = vld [vmem:[%s3 + $0x30] sm:$0xff]
        %v474 = vld [vmem:[%s3 + $0x38] sm:$0xff]
        %vm475 = vcmask 523264
        %v477 = vsel %vm475, %v462, 0
        %v480 = vsel %vm475, %v465, 0
        %482 = vmatpush.msra.mxu0 0.0
        %483 = vmatpush.msra.mxu0 0.0
        %484 = vmatpush.msra.mxu0 0.0
        %485 = vmatpush.msra.mxu0 0.0
        %486 = vmatpush.msra.mxu0 0.0
        %487 = vmatpush.msra.mxu0 0.0
        %488 = vmatpush.msra.mxu0 0.0
        %489 = vmatpush.msra.mxu0 0.0
        %490 = vmatpush.msra.mxu0 %v474
        %491 = vmatpush.msra.mxu0 %v473
        %492 = vmatpush.msra.mxu0 %v472
        %493 = vmatpush.msra.mxu0 %v471
        %494 = vmatpush.msra.mxu0 %v470
        %495 = vmatpush.msra.mxu0 %v469
        %496 = vmatpush.msra.mxu0 %v468
        %497 = vmatpush.msra.mxu0 %v467
        %498 = vmatmul.f32.gmra.mxu0 %v477
        %v499 = vpop.f32.mrf.mxu0
        %v500 = vadd.f32 0.0, %v499
        %501 = vmatmul.f32.gmra.mxu0 %v480
        %v502 = vpop.f32.mrf.mxu0
        %v503 = vadd.f32 0.0, %v502
        %504 = vdwg.mxu0
        %v506 = vsel %vm475, %v424, 0
        %v509 = vsel %vm475, %v425, 0
        %511 = vmatpush.msra.mxu0 0.0
        %512 = vmatpush.msra.mxu0 0.0
        %513 = vmatpush.msra.mxu0 0.0
        %514 = vmatpush.msra.mxu0 0.0
        %515 = vmatpush.msra.mxu0 0.0
        %516 = vmatpush.msra.mxu0 0.0
        %517 = vmatpush.msra.mxu0 0.0
        %518 = vmatpush.msra.mxu0 0.0
        %519 = vmatpush.msra.mxu0 %v434
        %520 = vmatpush.msra.mxu0 %v433
        %521 = vmatpush.msra.mxu0 %v432
        %522 = vmatpush.msra.mxu0 %v431
        %523 = vmatpush.msra.mxu0 %v430
        %524 = vmatpush.msra.mxu0 %v429
        %525 = vmatpush.msra.mxu0 %v428
        %526 = vmatpush.msra.mxu0 %v427
        %527 = vmatmul.f32.gmra.mxu0 %v506
        %v528 = vpop.f32.mrf.mxu0
        %v529 = vadd.f32 %v500, %v528
        %530 = vmatmul.f32.gmra.mxu0 %v509
        %v531 = vpop.f32.mrf.mxu0
        %v532 = vadd.f32 %v503, %v531
        %533 = vdwg.mxu0
        %s534 = scalar_lea.vmem [#allocation5], 32
        %v535 = vld [vmem:[%s534] sm:$0xff]
        %v536 = vld [vmem:[%s534 + $0x8] sm:$0xff]
        %v538 = vsel %vm437, %v535, 0
        %v541 = vsel %vm437, %v536, 0
        %543 = vmatpush.msra.mxu0 0.0
        %544 = vmatpush.msra.mxu0 0.0
        %545 = vmatpush.msra.mxu0 0.0
        %546 = vmatpush.msra.mxu0 0.0
        %547 = vmatpush.msra.mxu0 0.0
        %548 = vmatpush.msra.mxu0 0.0
        %549 = vmatpush.msra.mxu0 0.0
        %550 = vmatpush.msra.mxu0 0.0
        %551 = vmatpush.msra.mxu0 0.0
        %552 = vmatpush.msra.mxu0 0.0
        %553 = vmatpush.msra.mxu0 0.0
        %554 = vmatpush.msra.mxu0 0.0
        %555 = vmatpush.msra.mxu0 0.0
        %556 = vmatpush.msra.mxu0 0.0
        %557 = vmatpush.msra.mxu0 %v425
        %558 = vmatpush.msra.mxu0 %v424
        %559 = vmatmul.f32.gmra.mxu0 %v538
        %v560 = vpop.f32.mrf.mxu0
        %v561 = vadd.f32 0.0, %v560
        %562 = vmatmul.f32.gmra.mxu0 %v541
        %v563 = vpop.f32.mrf.mxu0
        %v564 = vadd.f32 0.0, %v563
        %565 = vdwg.mxu0
        %s566 = scalar_lea.vmem %s3, 128
        %v567 = vld [vmem:[%s566] sm:$0xff]
        %v568 = vld [vmem:[%s566 + $0x8] sm:$0xff]
        %v569 = vld [vmem:[%s566 + $0x10] sm:$0xff]
        %v570 = vld [vmem:[%s566 + $0x18] sm:$0xff]
        %v571 = vld [vmem:[%s566 + $0x20] sm:$0xff]
        %v572 = vld [vmem:[%s566 + $0x28] sm:$0xff]
        %v573 = vld [vmem:[%s566 + $0x30] sm:$0xff]
        %v574 = vld [vmem:[%s566 + $0x38] sm:$0xff]
        %v576 = vsel %vm475, %v561, 0
        %v579 = vsel %vm475, %v564, 0
        %581 = vmatpush.msra.mxu0 0.0
        %582 = vmatpush.msra.mxu0 0.0
        %583 = vmatpush.msra.mxu0 0.0
        %584 = vmatpush.msra.mxu0 0.0
        %585 = vmatpush.msra.mxu0 0.0
        %586 = vmatpush.msra.mxu0 0.0
        %587 = vmatpush.msra.mxu0 0.0
        %588 = vmatpush.msra.mxu0 0.0
        %589 = vmatpush.msra.mxu0 %v574
        %590 = vmatpush.msra.mxu0 %v573
        %591 = vmatpush.msra.mxu0 %v572
        %592 = vmatpush.msra.mxu0 %v571
        %593 = vmatpush.msra.mxu0 %v570
        %594 = vmatpush.msra.mxu0 %v569
        %595 = vmatpush.msra.mxu0 %v568
        %596 = vmatpush.msra.mxu0 %v567
        %597 = vmatmul.f32.gmra.mxu0 %v576
        %v598 = vpop.f32.mrf.mxu0
        %v599 = vadd.f32 0.0, %v598
        %600 = vmatmul.f32.gmra.mxu0 %v579
        %v601 = vpop.f32.mrf.mxu0
        %v602 = vadd.f32 0.0, %v601
        %603 = vdwg.mxu0
        %v604 = vadd.f32 %v529, %v599
        %v605 = vadd.f32 %v532, %v602
        %v606 = vld [vmem:[%s6] sm:$0x1]
        %v608 = vperm.slane %v606, 0
        %v610 = vadd.f32 %v604, %v608
        %v611 = vadd.f32 %v605, %v608
        %v612 = vmax.f32 %v610, 0.0
        %v613 = vmax.f32 %v611, 0.0
        %s614 = scalar_lea.vmem %s4, 128
        %v615 = vld [vmem:[%s614] sm:$0xff]
        %v616 = vld [vmem:[%s614 + $0x8] sm:$0xff]
        %v617 = vld [vmem:[%s614 + $0x10] sm:$0xff]
        %v618 = vld [vmem:[%s614 + $0x18] sm:$0xff]
        %v619 = vld [vmem:[%s614 + $0x20] sm:$0xff]
        %v620 = vld [vmem:[%s614 + $0x28] sm:$0xff]
        %v621 = vld [vmem:[%s614 + $0x30] sm:$0xff]
        %v622 = vld [vmem:[%s614 + $0x38] sm:$0xff]
        %v623 = vld [vmem:[%s614 + $0x40] sm:$0xff]
        %v624 = vld [vmem:[%s614 + $0x48] sm:$0xff]
        %v625 = vld [vmem:[%s614 + $0x50] sm:$0xff]
        %v626 = vld [vmem:[%s614 + $0x58] sm:$0xff]
        %v627 = vld [vmem:[%s614 + $0x60] sm:$0xff]
        %v628 = vld [vmem:[%s614 + $0x68] sm:$0xff]
        %v629 = vld [vmem:[%s614 + $0x70] sm:$0xff]
        %v630 = vld [vmem:[%s614 + $0x78] sm:$0xff]
        %631 = vmatpush.msra.mxu0 0.0
        %632 = vmatpush.msra.mxu0 0.0
        %633 = vmatpush.msra.mxu0 0.0
        %634 = vmatpush.msra.mxu0 0.0
        %635 = vmatpush.msra.mxu0 0.0
        %636 = vmatpush.msra.mxu0 0.0
        %637 = vmatpush.msra.mxu0 0.0
        %638 = vmatpush.msra.mxu0 0.0
        %639 = vmatpush.msra.mxu0 0.0
        %640 = vmatpush.msra.mxu0 0.0
        %641 = vmatpush.msra.mxu0 0.0
        %642 = vmatpush.msra.mxu0 0.0
        %643 = vmatpush.msra.mxu0 0.0
        %644 = vmatpush.msra.mxu0 0.0
        %645 = vmatpush.msra.mxu0 %v613
        %646 = vmatpush.msra.mxu0 %v612
        %647 = vmatmul.f32.gmra.mxu0 %v439
        %v648 = vpop.f32.mrf.mxu0
        %v649 = vadd.f32 0.0, %v648
        %650 = vmatmul.f32.gmra.mxu0 %v442
        %v651 = vpop.f32.mrf.mxu0
        %v652 = vadd.f32 0.0, %v651
        %653 = vdwg.mxu0
        %v654 = vld [vmem:[%s4] sm:$0xff]
        %v655 = vld [vmem:[%s4 + $0x8] sm:$0xff]
        %v656 = vld [vmem:[%s4 + $0x10] sm:$0xff]
        %v657 = vld [vmem:[%s4 + $0x18] sm:$0xff]
        %v658 = vld [vmem:[%s4 + $0x20] sm:$0xff]
        %v659 = vld [vmem:[%s4 + $0x28] sm:$0xff]
        %v660 = vld [vmem:[%s4 + $0x30] sm:$0xff]
        %v661 = vld [vmem:[%s4 + $0x38] sm:$0xff]
        %v662 = vld [vmem:[%s4 + $0x40] sm:$0xff]
        %v663 = vld [vmem:[%s4 + $0x48] sm:$0xff]
        %v664 = vld [vmem:[%s4 + $0x50] sm:$0xff]
        %v665 = vld [vmem:[%s4 + $0x58] sm:$0xff]
        %v666 = vld [vmem:[%s4 + $0x60] sm:$0xff]
        %v667 = vld [vmem:[%s4 + $0x68] sm:$0xff]
        %v668 = vld [vmem:[%s4 + $0x70] sm:$0xff]
        %v669 = vld [vmem:[%s4 + $0x78] sm:$0xff]
        %670 = vmatpush.msra.mxu0 %v669
        %671 = vmatpush.msra.mxu0 %v668
        %672 = vmatpush.msra.mxu0 %v667
        %673 = vmatpush.msra.mxu0 %v666
        %674 = vmatpush.msra.mxu0 %v665
        %675 = vmatpush.msra.mxu0 %v664
        %676 = vmatpush.msra.mxu0 %v663
        %677 = vmatpush.msra.mxu0 %v662
        %678 = vmatpush.msra.mxu0 %v661
        %679 = vmatpush.msra.mxu0 %v660
        %680 = vmatpush.msra.mxu0 %v659
        %681 = vmatpush.msra.mxu0 %v658
        %682 = vmatpush.msra.mxu0 %v657
        %683 = vmatpush.msra.mxu0 %v656
        %684 = vmatpush.msra.mxu0 %v655
        %685 = vmatpush.msra.mxu0 %v654
        %686 = vmatmul.f32.gmra.mxu0 %v649
        %v687 = vpop.f32.mrf.mxu0
        %v688 = vadd.f32 0.0, %v687
        %689 = vmatmul.f32.gmra.mxu0 %v652
        %v690 = vpop.f32.mrf.mxu0
        %v691 = vadd.f32 0.0, %v690
        %692 = vdwg.mxu0
        %693 = vmatpush.msra.mxu0 %v630
        %694 = vmatpush.msra.mxu0 %v629
        %695 = vmatpush.msra.mxu0 %v628
        %696 = vmatpush.msra.mxu0 %v627
        %697 = vmatpush.msra.mxu0 %v626
        %698 = vmatpush.msra.mxu0 %v625
        %699 = vmatpush.msra.mxu0 %v624
        %700 = vmatpush.msra.mxu0 %v623
        %701 = vmatpush.msra.mxu0 %v622
        %702 = vmatpush.msra.mxu0 %v621
        %703 = vmatpush.msra.mxu0 %v620
        %704 = vmatpush.msra.mxu0 %v619
        %705 = vmatpush.msra.mxu0 %v618
        %706 = vmatpush.msra.mxu0 %v617
        %707 = vmatpush.msra.mxu0 %v616
        %708 = vmatpush.msra.mxu0 %v615
        %709 = vmatmul.f32.gmra.mxu0 %v612
        %v710 = vpop.f32.mrf.mxu0
        %v711 = vadd.f32 %v688, %v710
        %712 = vmatmul.f32.gmra.mxu0 %v613
        %v713 = vpop.f32.mrf.mxu0
        %v714 = vadd.f32 %v691, %v713
        %715 = vdwg.mxu0
        %716 = vmatpush.msra.mxu0 0.0
        %717 = vmatpush.msra.mxu0 0.0
        %718 = vmatpush.msra.mxu0 0.0
        %719 = vmatpush.msra.mxu0 0.0
        %720 = vmatpush.msra.mxu0 0.0
        %721 = vmatpush.msra.mxu0 0.0
        %722 = vmatpush.msra.mxu0 0.0
        %723 = vmatpush.msra.mxu0 0.0
        %724 = vmatpush.msra.mxu0 0.0
        %725 = vmatpush.msra.mxu0 0.0
        %726 = vmatpush.msra.mxu0 0.0
        %727 = vmatpush.msra.mxu0 0.0
        %728 = vmatpush.msra.mxu0 0.0
        %729 = vmatpush.msra.mxu0 0.0
        %730 = vmatpush.msra.mxu0 %v613
        %731 = vmatpush.msra.mxu0 %v612
        %732 = vmatmul.f32.gmra.mxu0 %v538
        %v733 = vpop.f32.mrf.mxu0
        %v734 = vadd.f32 0.0, %v733
        %735 = vmatmul.f32.gmra.mxu0 %v541
        %v736 = vpop.f32.mrf.mxu0
        %v737 = vadd.f32 0.0, %v736
        %738 = vdwg.mxu0
        %s739 = scalar_lea.vmem %s4, 256
        %v740 = vld [vmem:[%s739] sm:$0xff]
        %v741 = vld [vmem:[%s739 + $0x8] sm:$0xff]
        %v742 = vld [vmem:[%s739 + $0x10] sm:$0xff]
        %v743 = vld [vmem:[%s739 + $0x18] sm:$0xff]
        %v744 = vld [vmem:[%s739 + $0x20] sm:$0xff]
        %v745 = vld [vmem:[%s739 + $0x28] sm:$0xff]
        %v746 = vld [vmem:[%s739 + $0x30] sm:$0xff]
        %v747 = vld [vmem:[%s739 + $0x38] sm:$0xff]
        %v748 = vld [vmem:[%s739 + $0x40] sm:$0xff]
        %v749 = vld [vmem:[%s739 + $0x48] sm:$0xff]
        %v750 = vld [vmem:[%s739 + $0x50] sm:$0xff]
        %v751 = vld [vmem:[%s739 + $0x58] sm:$0xff]
        %v752 = vld [vmem:[%s739 + $0x60] sm:$0xff]
        %v753 = vld [vmem:[%s739 + $0x68] sm:$0xff]
        %v754 = vld [vmem:[%s739 + $0x70] sm:$0xff]
        %v755 = vld [vmem:[%s739 + $0x78] sm:$0xff]
        %756 = vmatpush.msra.mxu0 %v755
        %757 = vmatpush.msra.mxu0 %v754
        %758 = vmatpush.msra.mxu0 %v753
        %759 = vmatpush.msra.mxu0 %v752
        %760 = vmatpush.msra.mxu0 %v751
        %761 = vmatpush.msra.mxu0 %v750
        %762 = vmatpush.msra.mxu0 %v749
        %763 = vmatpush.msra.mxu0 %v748
        %764 = vmatpush.msra.mxu0 %v747
        %765 = vmatpush.msra.mxu0 %v746
        %766 = vmatpush.msra.mxu0 %v745
        %767 = vmatpush.msra.mxu0 %v744
        %768 = vmatpush.msra.mxu0 %v743
        %769 = vmatpush.msra.mxu0 %v742
        %770 = vmatpush.msra.mxu0 %v741
        %771 = vmatpush.msra.mxu0 %v740
        %772 = vmatmul.f32.gmra.mxu0 %v734
        %v773 = vpop.f32.mrf.mxu0
        %v774 = vadd.f32 0.0, %v773
        %775 = vmatmul.f32.gmra.mxu0 %v737
        %v776 = vpop.f32.mrf.mxu0
        %v777 = vadd.f32 0.0, %v776
        %778 = vdwg.mxu0
        %v779 = vadd.f32 %v711, %v774
        %v780 = vadd.f32 %v714, %v777
        %v781 = vld [vmem:[%s7] sm:$0x1]
        %v783 = vperm.slane %v781, 0
        %v785 = vadd.f32 %v779, %v783
        %v786 = vadd.f32 %v780, %v783
        %v787 = vmax.f32 %v785, 0.0
        %v788 = vmax.f32 %v786, 0.0
        %s789 = scalar_lea.vmem [#allocation7], 8
        %v790 = vld [vmem:[%s789] sm:$0xff]
        %v792 = vsel %vm437, %v790, 0
        %794 = vmatpush.msra.mxu0 0.0
        %795 = vmatpush.msra.mxu0 0.0
        %796 = vmatpush.msra.mxu0 0.0
        %797 = vmatpush.msra.mxu0 0.0
        %798 = vmatpush.msra.mxu0 0.0
        %799 = vmatpush.msra.mxu0 0.0
        %800 = vmatpush.msra.mxu0 0.0
        %801 = vmatpush.msra.mxu0 0.0
        %802 = vmatpush.msra.mxu0 0.0
        %803 = vmatpush.msra.mxu0 0.0
        %804 = vmatpush.msra.mxu0 0.0
        %805 = vmatpush.msra.mxu0 0.0
        %806 = vmatpush.msra.mxu0 0.0
        %807 = vmatpush.msra.mxu0 0.0
        %808 = vmatpush.msra.mxu0 %v788
        %809 = vmatpush.msra.mxu0 %v787
        %810 = vmatmul.f32.gmra.mxu0 %v792
        %v811 = vpop.f32.mrf.mxu0
        %v812 = vadd.f32 0.0, %v811
        %813 = vdwg.mxu0
        %s814 = scalar_lea.vmem %s5, 128
        %v815 = vld [vmem:[%s814] sm:$0xff]
        %v816 = vld [vmem:[%s814 + $0x8] sm:$0xff]
        %v817 = vld [vmem:[%s814 + $0x10] sm:$0xff]
        %v818 = vld [vmem:[%s814 + $0x18] sm:$0xff]
        %v819 = vld [vmem:[%s814 + $0x20] sm:$0xff]
        %v820 = vld [vmem:[%s814 + $0x28] sm:$0xff]
        %v821 = vld [vmem:[%s814 + $0x30] sm:$0xff]
        %v822 = vld [vmem:[%s814 + $0x38] sm:$0xff]
        %v823 = vld [vmem:[%s814 + $0x40] sm:$0xff]
        %v824 = vld [vmem:[%s814 + $0x48] sm:$0xff]
        %v825 = vld [vmem:[%s814 + $0x50] sm:$0xff]
        %v826 = vld [vmem:[%s814 + $0x58] sm:$0xff]
        %v827 = vld [vmem:[%s814 + $0x60] sm:$0xff]
        %v828 = vld [vmem:[%s814 + $0x68] sm:$0xff]
        %v829 = vld [vmem:[%s814 + $0x70] sm:$0xff]
        %v830 = vld [vmem:[%s814 + $0x78] sm:$0xff]
        %v831 = vld [vmem:[#allocation7] sm:$0xff]
        %v833 = vsel %vm437, %v831, 0
        %835 = vmatpush.msra.mxu0 0.0
        %836 = vmatpush.msra.mxu0 0.0
        %837 = vmatpush.msra.mxu0 0.0
        %838 = vmatpush.msra.mxu0 0.0
        %839 = vmatpush.msra.mxu0 0.0
        %840 = vmatpush.msra.mxu0 0.0
        %841 = vmatpush.msra.mxu0 0.0
        %842 = vmatpush.msra.mxu0 0.0
        %843 = vmatpush.msra.mxu0 0.0
        %844 = vmatpush.msra.mxu0 0.0
        %845 = vmatpush.msra.mxu0 0.0
        %846 = vmatpush.msra.mxu0 0.0
        %847 = vmatpush.msra.mxu0 0.0
        %848 = vmatpush.msra.mxu0 0.0
        %849 = vmatpush.msra.mxu0 %v788
        %850 = vmatpush.msra.mxu0 %v787
        %851 = vmatmul.f32.gmra.mxu0 %v833
        %v852 = vpop.f32.mrf.mxu0
        %v853 = vadd.f32 0.0, %v852
        %854 = vdwg.mxu0
        %v855 = vld [vmem:[%s5] sm:$0xff]
        %v856 = vld [vmem:[%s5 + $0x8] sm:$0xff]
        %v857 = vld [vmem:[%s5 + $0x10] sm:$0xff]
        %v858 = vld [vmem:[%s5 + $0x18] sm:$0xff]
        %v859 = vld [vmem:[%s5 + $0x20] sm:$0xff]
        %v860 = vld [vmem:[%s5 + $0x28] sm:$0xff]
        %v861 = vld [vmem:[%s5 + $0x30] sm:$0xff]
        %v862 = vld [vmem:[%s5 + $0x38] sm:$0xff]
        %v863 = vld [vmem:[%s5 + $0x40] sm:$0xff]
        %v864 = vld [vmem:[%s5 + $0x48] sm:$0xff]
        %v865 = vld [vmem:[%s5 + $0x50] sm:$0xff]
        %v866 = vld [vmem:[%s5 + $0x58] sm:$0xff]
        %v867 = vld [vmem:[%s5 + $0x60] sm:$0xff]
        %v868 = vld [vmem:[%s5 + $0x68] sm:$0xff]
        %v869 = vld [vmem:[%s5 + $0x70] sm:$0xff]
        %v870 = vld [vmem:[%s5 + $0x78] sm:$0xff]
        %871 = vmatpush.msra.mxu0 %v870
        %872 = vmatpush.msra.mxu0 %v869
        %873 = vmatpush.msra.mxu0 %v868
        %874 = vmatpush.msra.mxu0 %v867
        %875 = vmatpush.msra.mxu0 %v866
        %876 = vmatpush.msra.mxu0 %v865
        %877 = vmatpush.msra.mxu0 %v864
        %878 = vmatpush.msra.mxu0 %v863
        %879 = vmatpush.msra.mxu0 %v862
        %880 = vmatpush.msra.mxu0 %v861
        %881 = vmatpush.msra.mxu0 %v860
        %882 = vmatpush.msra.mxu0 %v859
        %883 = vmatpush.msra.mxu0 %v858
        %884 = vmatpush.msra.mxu0 %v857
        %885 = vmatpush.msra.mxu0 %v856
        %886 = vmatpush.msra.mxu0 %v855
        %887 = vmatmul.f32.gmra.mxu0 %v853
        %v888 = vpop.f32.mrf.mxu0
        %v889 = vadd.f32 0.0, %v888
        %890 = vdwg.mxu0
        %891 = vmatpush.msra.mxu0 %v830
        %892 = vmatpush.msra.mxu0 %v829
        %893 = vmatpush.msra.mxu0 %v828
        %894 = vmatpush.msra.mxu0 %v827
        %895 = vmatpush.msra.mxu0 %v826
        %896 = vmatpush.msra.mxu0 %v825
        %897 = vmatpush.msra.mxu0 %v824
        %898 = vmatpush.msra.mxu0 %v823
        %899 = vmatpush.msra.mxu0 %v822
        %900 = vmatpush.msra.mxu0 %v821
        %901 = vmatpush.msra.mxu0 %v820
        %902 = vmatpush.msra.mxu0 %v819
        %903 = vmatpush.msra.mxu0 %v818
        %904 = vmatpush.msra.mxu0 %v817
        %905 = vmatpush.msra.mxu0 %v816
        %906 = vmatpush.msra.mxu0 %v815
        %907 = vmatmul.f32.gmra.mxu0 %v812
        %v908 = vpop.f32.mrf.mxu0
        %v909 = vadd.f32 %v889, %v908
        %910 = vdwg.mxu0
        %s911 = scalar_lea.vmem [#allocation7], 16
        %v912 = vld [vmem:[%s911] sm:$0xff]
        %v914 = vsel %vm437, %v912, 0
        %916 = vmatpush.msra.mxu0 0.0
        %917 = vmatpush.msra.mxu0 0.0
        %918 = vmatpush.msra.mxu0 0.0
        %919 = vmatpush.msra.mxu0 0.0
        %920 = vmatpush.msra.mxu0 0.0
        %921 = vmatpush.msra.mxu0 0.0
        %922 = vmatpush.msra.mxu0 0.0
        %923 = vmatpush.msra.mxu0 0.0
        %924 = vmatpush.msra.mxu0 0.0
        %925 = vmatpush.msra.mxu0 0.0
        %926 = vmatpush.msra.mxu0 0.0
        %927 = vmatpush.msra.mxu0 0.0
        %928 = vmatpush.msra.mxu0 0.0
        %929 = vmatpush.msra.mxu0 0.0
        %930 = vmatpush.msra.mxu0 %v788
        %931 = vmatpush.msra.mxu0 %v787
        %932 = vmatmul.f32.gmra.mxu0 %v914
        %v933 = vpop.f32.mrf.mxu0
        %v934 = vadd.f32 0.0, %v933
        %935 = vdwg.mxu0
        %s936 = scalar_lea.vmem %s5, 256
        %v937 = vld [vmem:[%s936] sm:$0xff]
        %v938 = vld [vmem:[%s936 + $0x8] sm:$0xff]
        %v939 = vld [vmem:[%s936 + $0x10] sm:$0xff]
        %v940 = vld [vmem:[%s936 + $0x18] sm:$0xff]
        %v941 = vld [vmem:[%s936 + $0x20] sm:$0xff]
        %v942 = vld [vmem:[%s936 + $0x28] sm:$0xff]
        %v943 = vld [vmem:[%s936 + $0x30] sm:$0xff]
        %v944 = vld [vmem:[%s936 + $0x38] sm:$0xff]
        %v945 = vld [vmem:[%s936 + $0x40] sm:$0xff]
        %v946 = vld [vmem:[%s936 + $0x48] sm:$0xff]
        %v947 = vld [vmem:[%s936 + $0x50] sm:$0xff]
        %v948 = vld [vmem:[%s936 + $0x58] sm:$0xff]
        %v949 = vld [vmem:[%s936 + $0x60] sm:$0xff]
        %v950 = vld [vmem:[%s936 + $0x68] sm:$0xff]
        %v951 = vld [vmem:[%s936 + $0x70] sm:$0xff]
        %v952 = vld [vmem:[%s936 + $0x78] sm:$0xff]
        %953 = vmatpush.msra.mxu0 %v952
        %954 = vmatpush.msra.mxu0 %v951
        %955 = vmatpush.msra.mxu0 %v950
        %956 = vmatpush.msra.mxu0 %v949
        %957 = vmatpush.msra.mxu0 %v948
        %958 = vmatpush.msra.mxu0 %v947
        %959 = vmatpush.msra.mxu0 %v946
        %960 = vmatpush.msra.mxu0 %v945
        %961 = vmatpush.msra.mxu0 %v944
        %962 = vmatpush.msra.mxu0 %v943
        %963 = vmatpush.msra.mxu0 %v942
        %964 = vmatpush.msra.mxu0 %v941
        %965 = vmatpush.msra.mxu0 %v940
        %966 = vmatpush.msra.mxu0 %v939
        %967 = vmatpush.msra.mxu0 %v938
        %968 = vmatpush.msra.mxu0 %v937
        %969 = vmatmul.f32.gmra.mxu0 %v934
        %v970 = vpop.f32.mrf.mxu0
        %v971 = vadd.f32 0.0, %v970
        %972 = vdwg.mxu0
        %v973 = vadd.f32 %v909, %v971
        %v974 = vld [vmem:[%s8] sm:$0x1]
        %v976 = vperm.slane %v974, 0
        %v978 = vadd.f32 %v973, %v976
        %v979 = vmax.f32 %v978, 0.0
        %980 = vst [vmem:[%s416] sm:$0xff] %v787
        %981 = vst [vmem:[%s416 + $0x8] sm:$0xff] %v788
        %982 = vst.msk [vmem:[%s423] sm:$0xff] %vm475, %v979
        %s983 = sand.u32 %s234, 1
        %s984 = scalar_lea.sflag [#allocation4], %s983
        %s985 = sand.u32 %s234, 1
        %s986 = smul.addr %s985, 16
        %s987 = scalar_lea.vmem [#allocation8], %s986
        %s988 = sand.u32 %s260, 1
        %s989 = scalar_lea.sflag [#allocation10], %s988
        %s990 = sand.u32 %s260, 1
        %s991 = smul.addr %s990, 8
        %s992 = scalar_lea.vmem [#allocation9], %s991
        // Predicated region
        $region69: #{tpu_custom_call.1} parent=55 // pred_check
          %p993 = pneg %p244
        $region70: #{tpu_custom_call.1} parent=55 // pred_check_branch
          %995 = sbr.rel (%p993) target = $region72
        $region71: #{tpu_custom_call.1} parent=55 // pred_region
          %997 = vsyncadd %s984, 0
          %s998 = smul.addr %s32, 2
          %s999 = smul.addr %s998, 8
          %s1000 = scalar_lea.hbm %s9, %s999
          %s1001 = sshll.u32 %s987, 4
          %s1002 = int_to_ptr.vmem [resolvable:$true] %s1001
          %s1003 = sshll.u32 %s1000, 4
          %s1004 = int_to_ptr.hbm [resolvable:$true] %s1003
          %1009 = dma.vmem_to_hbm [thread:$0]  %s1002, 256, %s1004, %s984, 128, 128, 8
        $region72: #{tpu_custom_call.1} parent=55 // pred_fallthru
          _
        // Predicated region
        $region73: #{tpu_custom_call.1} parent=55 // pred_check
          %p1010 = pneg %p270
        $region74: #{tpu_custom_call.1} parent=55 // pred_check_branch
          %1012 = sbr.rel (%p1010) target = $region76
        $region75: #{tpu_custom_call.1} parent=55 // pred_region
          %1014 = vsyncadd %s989, 0
          %s1015 = smul.addr %s32, 8
          %s1016 = scalar_lea.hbm %s10, %s1015
          %s1018 = sshll.u32 %s992, 4
          %s1019 = int_to_ptr.vmem [resolvable:$true] %s1018
          %s1020 = sshll.u32 %s1016, 4
          %s1021 = int_to_ptr.hbm [resolvable:$true] %s1020
          %1023 = dma.vmem_to_hbm [thread:$0]  %s1019, 128, %s1021, %s989
        $region76: #{tpu_custom_call.1} parent=55 // pred_fallthru
          _
      $region56: #{tpu_custom_call.1} parent=5 // pred_fallthru
        _
      %p1024 = scmp.le.s32.totalorder 2, %s27
      // Predicated region
      $region77: #{tpu_custom_call.1} parent=5 // pred_check
        %p1025 = pneg %p1024
      $region78: #{tpu_custom_call.1} parent=5 // pred_check_branch
        %1027 = sbr.rel (%p1025) target = $region80
      $region79: #{tpu_custom_call.1} parent=5 // pred_region
        %s1028 = ssub.s32 %s27, 2
        // Predicated region
        $region81: #{tpu_custom_call.1} parent=79 // pred_check
          %p1029 = pneg %p250
        $region82: #{tpu_custom_call.1} parent=79 // pred_check_branch
          %1031 = sbr.rel (%p1029) target = $region84
        $region83: #{tpu_custom_call.1} parent=79 // pred_region
          %s1032 = sand.u32 %s235, 1
          %s1033 = scalar_lea.sflag [#allocation4], %s1032
          %s1034 = sand.u32 %s235, 1
          %s1035 = smul.addr %s1034, 16
          %s1036 = scalar_lea.vmem [#allocation8], %s1035
          %1038 = dma.done %s1033, 256
        $region84: #{tpu_custom_call.1} parent=79 // pred_fallthru
          _
        // Predicated region
        $region85: #{tpu_custom_call.1} parent=79 // pred_check
          %p1039 = pneg %p276
        $region86: #{tpu_custom_call.1} parent=79 // pred_check_branch
          %1041 = sbr.rel (%p1039) target = $region88
        $region87: #{tpu_custom_call.1} parent=79 // pred_region
          %s1042 = sand.u32 %s261, 1
          %s1043 = scalar_lea.sflag [#allocation10], %s1042
          %s1044 = sand.u32 %s261, 1
          %s1045 = smul.addr %s1044, 8
          %s1046 = scalar_lea.vmem [#allocation9], %s1045
          %1048 = dma.done %s1043, 128
        $region88: #{tpu_custom_call.1} parent=79 // pred_fallthru
          _
      $region80: #{tpu_custom_call.1} parent=5 // pred_fallthru
        _
    $region6: #{tpu_custom_call.1} parent=1 // loop_footer
      %s31 = sadd.s32 1, %s27
    $region7: #{tpu_custom_call.1} parent=1 // loop_footer_branch
      %26 = sbr.rel target = $region3
    $region8: #{tpu_custom_call.1} parent=1 // loop_exit
      _
    %1049 = vsyncpa [#allocation3], 1
    %s1050 = scalar_lea.sflag [#allocation3], 1
    %1051 = vsyncpa %s1050, 1
    %1052 = vsyncpa [#allocation6], 1
    %1053 = vsyncpa [#allocation4], 1
    %s1054 = scalar_lea.sflag [#allocation4], 1
    %1055 = vsyncpa %s1054, 1
    %1056 = vsyncpa [#allocation10], 1
    %s1057 = scalar_lea.sflag [#allocation10], 1
    %1058 = vsyncpa %s1057, 1

</llo_original>
